<compile_context>
chip_gen: v7x
topology: tpu7x:2x2x1
jax: 0.10.0
libtpu: 0.0.40
codegen_flags: <defaults>
</compile_context>

<pallas_src>
import jax
import jax.numpy as jnp
from jax.experimental import pallas as pl
from jax.experimental.pallas import tpu as pltpu

IN_F, H1, H2, OUT_F = 268, 128, 64, 8


def _round_up(n, m):
    return ((n + m - 1) // m) * m


def mlp_kernel(x_ref, w1_ref, b1_ref, w2_ref, b2_ref, w3_ref, b3_ref, o_ref):
    # x tile arrives f32 (single HBM read of the dominant stream); cast to bf16
    # here in VMEM — VALU has plenty of slack and the cast hides under the DMA.
    x = x_ref[...].astype(jnp.bfloat16)

    # fc1 + ReLU  (bf16 MXU operands, f32 accumulation, f32 bias/ReLU)
    h = jnp.dot(x, w1_ref[...], preferred_element_type=jnp.float32) + b1_ref[...]
    h = jnp.maximum(h, 0.0).astype(jnp.bfloat16)

    # fc2 + ReLU
    h = jnp.dot(h, w2_ref[...], preferred_element_type=jnp.float32) + b2_ref[...]
    h = jnp.maximum(h, 0.0).astype(jnp.bfloat16)

    # fc3 (no activation) -> f32 output, matching the PyTorch module's dtype
    o_ref[...] = jnp.dot(h, w3_ref[...], preferred_element_type=jnp.float32) + b3_ref[...]


def _choose_tb(B, block_b):
    """Pick the batch tile: big enough to amortize per-step overhead, but
    guaranteeing >= 2 grid steps when B allows it (keeps v7x's 2nd TC busy)."""
    if B <= 8:
        return B  # full-dim block; avoids relying on sublane edge padding
    half = _round_up(pl.cdiv(B, 2), 8)      # ~half the batch, sublane-aligned
    return max(8, min(block_b, half))


def mlp_forward(x, kernel_params, *, block_b=4096):
    """x: any shape whose total size is divisible by 268 (mirrors x.view(-1, 268)).
    kernel_params: output of prepare_params() (bf16 weights, f32 (1,N) biases)."""
    w1, b1, w2, b2, w3, b3 = kernel_params
    x2d = x.reshape(-1, IN_F).astype(jnp.float32)  # no-op cast if already f32
    B = x2d.shape[0]

    tb = _choose_tb(B, block_b)
    grid = (pl.cdiv(B, tb),)

    # VMEM budget: double-buffered f32 x tile + f32 out tile (lane-padded) + weights.
    lane = lambda n: _round_up(n, 128)
    x_tile_bytes = tb * lane(IN_F) * 4
    o_tile_bytes = tb * lane(OUT_F) * 4
    w_bytes = (lane(IN_F) * H1 + H1 * H2 + H2 * lane(OUT_F)) * 2 + (H1 + H2 + lane(OUT_F)) * 4
    vmem_needed = 2 * (x_tile_bytes + o_tile_bytes + w_bytes) + (2 << 20)
    vmem_limit = min(max(vmem_needed, 16 << 20), 48 << 20)

    return pl.pallas_call(
        mlp_kernel,
        out_shape=jax.ShapeDtypeStruct((B, OUT_F), jnp.float32),
        grid=grid,
        in_specs=[
            # activation stream: batch-tiled, auto double-buffered by Pallas
            pl.BlockSpec((tb, IN_F), lambda i: (i, 0)),
            # weights / biases: constant block index -> fetched once, VMEM-resident
            pl.BlockSpec((IN_F, H1), lambda i: (0, 0)),
            pl.BlockSpec((1, H1), lambda i: (0, 0)),
            pl.BlockSpec((H1, H2), lambda i: (0, 0)),
            pl.BlockSpec((1, H2), lambda i: (0, 0)),
            pl.BlockSpec((H2, OUT_F), lambda i: (0, 0)),
            pl.BlockSpec((1, OUT_F), lambda i: (0, 0)),
        ],
        out_specs=pl.BlockSpec((tb, OUT_F), lambda i: (i, 0)),
        compiler_params=pltpu.CompilerParams(
            dimension_semantics=("parallel",),   # batch tiles independent -> megacore split
            vmem_limit_bytes=vmem_limit,
        ),
    )(x2d, w1, b1, w2, b2, w3, b3)


def init_params(key):
    """f32 params mirroring nn.Linear defaults: uniform(-1/sqrt(fan_in), 1/sqrt(fan_in)).
    Weights stored as (in, out) so the kernel computes x @ W."""
    def linear(key, fan_in, fan_out):
        kw, kb = jax.random.split(key)
        bound = 1.0 / jnp.sqrt(jnp.float32(fan_in))
        w = jax.random.uniform(kw, (fan_in, fan_out), jnp.float32, -bound, bound)
        b = jax.random.uniform(kb, (1, fan_out), jnp.float32, -bound, bound)
        return w, b

    k1, k2, k3 = jax.random.split(key, 3)
    w1, b1 = linear(k1, IN_F, H1)
    w2, b2 = linear(k2, H1, H2)
    w3, b3 = linear(k3, H2, OUT_F)
    return (w1, b1, w2, b2, w3, b3)


def prepare_params(params):
    """One-time cast to the kernel's dtypes (bf16 weights, f32 biases).
    Hoisted out of mlp_forward so repeated calls don't re-emit convert ops."""
    w1, b1, w2, b2, w3, b3 = params
    return (w1.astype(jnp.bfloat16), b1.astype(jnp.float32),
            w2.astype(jnp.bfloat16), b2.astype(jnp.float32),
            w3.astype(jnp.bfloat16), b3.astype(jnp.float32))


def reference_forward_f32(x, params):
    """Pure-f32 JAX reference (exact PyTorch-module semantics)."""
    w1, b1, w2, b2, w3, b3 = params
    h = x.reshape(-1, IN_F).astype(jnp.float32)
    h = jnp.maximum(h @ w1 + b1, 0.0)
    h = jnp.maximum(h @ w2 + b2, 0.0)
    return h @ w3 + b3


def reference_forward_bf16(x, params):
    """JAX reference with the same bf16-operand / f32-accumulate numerics as the kernel."""
    w1, b1, w2, b2, w3, b3 = params
    h = x.reshape(-1, IN_F).astype(jnp.bfloat16)
    h = jnp.dot(h, w1.astype(jnp.bfloat16), preferred_element_type=jnp.float32) + b1
    h = jnp.maximum(h, 0.0).astype(jnp.bfloat16)
    h = jnp.dot(h, w2.astype(jnp.bfloat16), preferred_element_type=jnp.float32) + b2
    h = jnp.maximum(h, 0.0).astype(jnp.bfloat16)
    return jnp.dot(h, w3.astype(jnp.bfloat16), preferred_element_type=jnp.float32) + b3


if __name__ == "__main__":
    key = jax.random.PRNGKey(0)
    k_params, k_x1, k_x2 = jax.random.split(key, 3)

    params = init_params(k_params)
    kparams = prepare_params(params)   # one-time dtype prep

    # small batch (view(-1, 268) is a no-op here)
    x_small = jax.random.normal(k_x1, (8, IN_F), dtype=jnp.float32)
    out_small = jax.block_until_ready(mlp_forward(x_small, kparams))
    assert out_small.shape == (8, OUT_F), out_small.shape
    assert jnp.allclose(out_small, reference_forward_bf16(x_small, params),
                        atol=1e-2, rtol=1e-2), "small-batch mismatch vs bf16 reference"
    assert jnp.allclose(out_small, reference_forward_f32(x_small, params),
                        atol=1e-1, rtol=1e-1), "small-batch mismatch vs f32 reference"

    # multi-step grid + partial last tile (B=40 -> tb=24 -> 2 grid steps, clipped tail)
    x_part = jax.random.normal(k_x2, (40, IN_F), dtype=jnp.float32)
    out_part = jax.block_until_ready(mlp_forward(x_part, kparams))
    assert out_part.shape == (40, OUT_F), out_part.shape
    assert jnp.allclose(out_part, reference_forward_bf16(x_part, params),
                        atol=1e-2, rtol=1e-2), "partial-tile mismatch vs bf16 reference"

    print("KERNEL_OK")
</pallas_src>

<mosaic_0001>
module attributes {stable_mosaic.version = 11 : i64} {
  func.func @mlp_kernel(%arg0: i32, %arg1: memref<8x268xf32, #tpu.memory_space<vmem>>, %arg2: memref<268x128xbf16, #tpu.memory_space<vmem>>, %arg3: memref<1x128xf32, #tpu.memory_space<vmem>>, %arg4: memref<128x64xbf16, #tpu.memory_space<vmem>>, %arg5: memref<1x64xf32, #tpu.memory_space<vmem>>, %arg6: memref<64x8xbf16, #tpu.memory_space<vmem>>, %arg7: memref<1x8xf32, #tpu.memory_space<vmem>>, %arg8: memref<8x8xf32, #tpu.memory_space<vmem>>) attributes {dimension_semantics = [#tpu.dimension_semantics<parallel>], iteration_bounds = array<i64: 1>, scalar_prefetch = 0 : i64, scratch_operands = 0 : i64, tpu.core_type = #tpu.core_type<tc>, window_params = [{transform_indices = @transform_0, window_bounds = array<i64: 8, 268>}, {pipeline_mode = #tpu.pipeline_mode<synchronous>, transform_indices = @transform_1, window_bounds = array<i64: 268, 128>}, {pipeline_mode = #tpu.pipeline_mode<synchronous>, transform_indices = @transform_2, window_bounds = array<i64: 1, 128>}, {pipeline_mode = #tpu.pipeline_mode<synchronous>, transform_indices = @transform_3, window_bounds = array<i64: 128, 64>}, {pipeline_mode = #tpu.pipeline_mode<synchronous>, transform_indices = @transform_4, window_bounds = array<i64: 1, 64>}, {pipeline_mode = #tpu.pipeline_mode<synchronous>, transform_indices = @transform_5, window_bounds = array<i64: 64, 8>}, {pipeline_mode = #tpu.pipeline_mode<synchronous>, transform_indices = @transform_6, window_bounds = array<i64: 1, 8>}, {transform_indices = @transform_7, window_bounds = array<i64: 8, 8>}]} {
    %c0 = arith.constant 0 : index
    %c0_0 = arith.constant 0 : index
    %0 = vector.load %arg1[%c0, %c0_0] : memref<8x268xf32, #tpu.memory_space<vmem>>, vector<8x268xf32>
    %1 = arith.truncf %0 : vector<8x268xf32> to vector<8x268xbf16>
    %c0_1 = arith.constant 0 : index
    %c0_2 = arith.constant 0 : index
    %2 = vector.load %arg2[%c0_1, %c0_2] : memref<268x128xbf16, #tpu.memory_space<vmem>>, vector<268x128xbf16>
    %cst = arith.constant dense<0.000000e+00> : vector<8x128xf32>
    %3 = tpu.matmul %1, %2, %cst {dimension_numbers = #tpu.dot_dimension_numbers<[1], [0], [0], [1], [0, 0, 1, 1], [], []>} : vector<8x268xbf16>, vector<268x128xbf16>, vector<8x128xf32> -> vector<8x128xf32>
    %c0_3 = arith.constant 0 : index
    %c0_4 = arith.constant 0 : index
    %4 = vector.load %arg3[%c0_3, %c0_4] : memref<1x128xf32, #tpu.memory_space<vmem>>, vector<1x128xf32>
    %5 = vector.broadcast %4 : vector<1x128xf32> to vector<8x128xf32>
    %6 = arith.addf %3, %5 : vector<8x128xf32>
    %cst_5 = arith.constant 0.000000e+00 : f32
    %7 = vector.broadcast %cst_5 : f32 to vector<8x128xf32>
    %8 = arith.maximumf %6, %7 : vector<8x128xf32>
    %9 = arith.truncf %8 : vector<8x128xf32> to vector<8x128xbf16>
    %c0_6 = arith.constant 0 : index
    %c0_7 = arith.constant 0 : index
    %10 = vector.load %arg4[%c0_6, %c0_7] : memref<128x64xbf16, #tpu.memory_space<vmem>>, vector<128x64xbf16>
    %cst_8 = arith.constant dense<0.000000e+00> : vector<8x64xf32>
    %11 = tpu.matmul %9, %10, %cst_8 {dimension_numbers = #tpu.dot_dimension_numbers<[1], [0], [0], [1], [0, 0, 1, 1], [], []>} : vector<8x128xbf16>, vector<128x64xbf16>, vector<8x64xf32> -> vector<8x64xf32>
    %c0_9 = arith.constant 0 : index
    %c0_10 = arith.constant 0 : index
    %12 = vector.load %arg5[%c0_9, %c0_10] : memref<1x64xf32, #tpu.memory_space<vmem>>, vector<1x64xf32>
    %13 = vector.broadcast %12 : vector<1x64xf32> to vector<8x64xf32>
    %14 = arith.addf %11, %13 : vector<8x64xf32>
    %cst_11 = arith.constant 0.000000e+00 : f32
    %15 = vector.broadcast %cst_11 : f32 to vector<8x64xf32>
    %16 = arith.maximumf %14, %15 : vector<8x64xf32>
    %17 = arith.truncf %16 : vector<8x64xf32> to vector<8x64xbf16>
    %c0_12 = arith.constant 0 : index
    %c0_13 = arith.constant 0 : index
    %18 = vector.load %arg6[%c0_12, %c0_13] : memref<64x8xbf16, #tpu.memory_space<vmem>>, vector<64x8xbf16>
    %cst_14 = arith.constant dense<0.000000e+00> : vector<8x8xf32>
    %19 = tpu.matmul %17, %18, %cst_14 {dimension_numbers = #tpu.dot_dimension_numbers<[1], [0], [0], [1], [0, 0, 1, 1], [], []>} : vector<8x64xbf16>, vector<64x8xbf16>, vector<8x8xf32> -> vector<8x8xf32>
    %c0_15 = arith.constant 0 : index
    %c0_16 = arith.constant 0 : index
    %20 = vector.load %arg7[%c0_15, %c0_16] : memref<1x8xf32, #tpu.memory_space<vmem>>, vector<1x8xf32>
    %21 = vector.broadcast %20 : vector<1x8xf32> to vector<8x8xf32>
    %22 = arith.addf %19, %21 : vector<8x8xf32>
    %c0_17 = arith.constant 0 : index
    %c0_18 = arith.constant 0 : index
    %23 = vector.load %arg8[%c0_17, %c0_18] : memref<8x8xf32, #tpu.memory_space<vmem>>, vector<8x8xf32>
    tpu.vector_store %arg8[%c0_17, %c0_18], %22 {strides = array<i32>} : memref<8x8xf32, #tpu.memory_space<vmem>>, vector<8x8xf32>,
    return
  }
  func.func @transform_0(%arg0: i32) -> (i32, i32) {
    %c0_i32 = arith.constant 0 : i32
    %c0_i32_0 = arith.constant 0 : i32
    return %arg0, %c0_i32 : i32, i32
  }
  func.func @transform_1(%arg0: i32) -> (i32, i32) {
    %c0_i32 = arith.constant 0 : i32
    %c0_i32_0 = arith.constant 0 : i32
    %c0_i32_1 = arith.constant 0 : i32
    return %c0_i32, %c0_i32_0 : i32, i32
  }
  func.func @transform_2(%arg0: i32) -> (i32, i32) {
    %c0_i32 = arith.constant 0 : i32
    %c0_i32_0 = arith.constant 0 : i32
    %c0_i32_1 = arith.constant 0 : i32
    return %c0_i32, %c0_i32_0 : i32, i32
  }
  func.func @transform_3(%arg0: i32) -> (i32, i32) {
    %c0_i32 = arith.constant 0 : i32
    %c0_i32_0 = arith.constant 0 : i32
    %c0_i32_1 = arith.constant 0 : i32
    return %c0_i32, %c0_i32_0 : i32, i32
  }
  func.func @transform_4(%arg0: i32) -> (i32, i32) {
    %c0_i32 = arith.constant 0 : i32
    %c0_i32_0 = arith.constant 0 : i32
    %c0_i32_1 = arith.constant 0 : i32
    return %c0_i32, %c0_i32_0 : i32, i32
  }
  func.func @transform_5(%arg0: i32) -> (i32, i32) {
    %c0_i32 = arith.constant 0 : i32
    %c0_i32_0 = arith.constant 0 : i32
    %c0_i32_1 = arith.constant 0 : i32
    return %c0_i32, %c0_i32_0 : i32, i32
  }
  func.func @transform_6(%arg0: i32) -> (i32, i32) {
    %c0_i32 = arith.constant 0 : i32
    %c0_i32_0 = arith.constant 0 : i32
    %c0_i32_1 = arith.constant 0 : i32
    return %c0_i32, %c0_i32_0 : i32, i32
  }
  func.func @transform_7(%arg0: i32) -> (i32, i32) {
    %c0_i32 = arith.constant 0 : i32
    %c0_i32_0 = arith.constant 0 : i32
    return %arg0, %c0_i32 : i32, i32
  }
}

</mosaic_0001>

<llo_original>
// kernel: tpu_custom_call.1
$region0: #{tpu_custom_call.1}
  #allocation0 [shape = 'u32[]', space=smem, size = 0x4, offset = 0x4, fixed_abs, tag = 'smem constant byte address 0x4 - core index']
  #allocation1 [shape = 'u32[144,128]{1,0:T(1,128)}', space=vmem, size = 0x12000, scoped, tag = 'internal scratch']
  %s0 = inlined_call_operand.vmem [shape: f32[8,268], index: 0, kind: input, shape index: {}]
  %s1 = inlined_call_operand.hbm [shape: bf16[268,128], index: 1, kind: input, shape index: {}]
  %s2 = inlined_call_operand.vmem [shape: f32[1,128], index: 2, kind: input, shape index: {}]
  %s3 = inlined_call_operand.vmem [shape: bf16[128,64], index: 3, kind: input, shape index: {}]
  %s4 = inlined_call_operand.vmem [shape: f32[1,64], index: 4, kind: input, shape index: {}]
  %s5 = inlined_call_operand.vmem [shape: bf16[64,8], index: 5, kind: input, shape index: {}]
  %s6 = inlined_call_operand.vmem [shape: f32[1,8], index: 6, kind: input, shape index: {}]
  %s7 = inlined_call_operand.hbm [shape: f32[8,8], index: 7, kind: output, shape index: {}]
  %s8 = sld [smem:[#allocation0]]
  $region42: #{tpu_custom_call.1} parent=0
    _
  %s10 = ssub.s32 1, %s8
  %s11 = scalar_select 0, %s10, %s8
  $region1: #{tpu_custom_call.1} parent=0
    #allocation2 [shape = 'u8[69632]{0}', space=vmem, size = 0x11000, scoped, tag = 'input window, operand 1, single buffered']
    #allocation3 [shape = 's32[1]{0}', space=sflag, size = 0x4, scoped, tag = 'scoped memory for tpu_custom_call.1']
    #allocation4 [shape = 's32[1]{0}', space=sflag, size = 0x4, scoped, tag = 'scoped memory for tpu_custom_call.1']
    #allocation5 [shape = 'u8[4096]{0}', space=vmem, size = 0x1000, scoped, tag = 'output window, operand 0, single buffered']
    %12 = vsyncpa [#allocation3], 0
    %13 = vsyncpa [#allocation4], 0
    // Predicated region
    $region2: #{tpu_custom_call.1} parent=1 // pred_check
      _
    $region3: #{tpu_custom_call.1} parent=1 // pred_check_branch
      %15 = sbr.rel (0) target = $region5
    $region4: #{tpu_custom_call.1} parent=1 // pred_region
      _
    $region5: #{tpu_custom_call.1} parent=1 // pred_fallthru
      _
    // Predicated region
    $region6: #{tpu_custom_call.1} parent=1 // pred_check
      _
    $region7: #{tpu_custom_call.1} parent=1 // pred_check_branch
      %17 = sbr.rel (0) target = $region9
    $region8: #{tpu_custom_call.1} parent=1 // pred_region
      %s19 = ssub.s32 2176, 2176
      %20 = vsyncadd [#allocation3], %s19
      %s21 = sshll.u32 [#allocation2], 4
      %s22 = int_to_ptr.vmem [resolvable:$true] %s21
      %27 = dma.hbm_to_vmem [thread:$0]  %s1, 2176, %s22, [#allocation3], 64, 64, 4
    $region9: #{tpu_custom_call.1} parent=1 // pred_fallthru
      _
    // Predicated region
    $region10: #{tpu_custom_call.1} parent=1 // pred_check
      _
    $region11: #{tpu_custom_call.1} parent=1 // pred_check_branch
      %29 = sbr.rel (0) target = $region13
    $region12: #{tpu_custom_call.1} parent=1 // pred_region
      _
    $region13: #{tpu_custom_call.1} parent=1 // pred_fallthru
      _
    // Predicated region
    $region14: #{tpu_custom_call.1} parent=1 // pred_check
      _
    $region15: #{tpu_custom_call.1} parent=1 // pred_check_branch
      %31 = sbr.rel (0) target = $region17
    $region16: #{tpu_custom_call.1} parent=1 // pred_region
      _
    $region17: #{tpu_custom_call.1} parent=1 // pred_fallthru
      _
    // Predicated region
    $region18: #{tpu_custom_call.1} parent=1 // pred_check
      _
    $region19: #{tpu_custom_call.1} parent=1 // pred_check_branch
      %33 = sbr.rel (0) target = $region21
    $region20: #{tpu_custom_call.1} parent=1 // pred_region
      _
    $region21: #{tpu_custom_call.1} parent=1 // pred_fallthru
      _
    // Predicated region
    $region22: #{tpu_custom_call.1} parent=1 // pred_check
      _
    $region23: #{tpu_custom_call.1} parent=1 // pred_check_branch
      %35 = sbr.rel (0) target = $region25
    $region24: #{tpu_custom_call.1} parent=1 // pred_region
      _
    $region25: #{tpu_custom_call.1} parent=1 // pred_fallthru
      _
    // Predicated region
    $region26: #{tpu_custom_call.1} parent=1 // pred_check
      _
    $region27: #{tpu_custom_call.1} parent=1 // pred_check_branch
      %37 = sbr.rel (0) target = $region29
    $region28: #{tpu_custom_call.1} parent=1 // pred_region
      _
    $region29: #{tpu_custom_call.1} parent=1 // pred_fallthru
      _
    // Predicated region
    $region30: #{tpu_custom_call.1} parent=1 // pred_check
      _
    $region31: #{tpu_custom_call.1} parent=1 // pred_check_branch
      %39 = sbr.rel (0) target = $region33
    $region32: #{tpu_custom_call.1} parent=1 // pred_region
      %40 = dma.done [#allocation3], 2176
    $region33: #{tpu_custom_call.1} parent=1 // pred_fallthru
      _
    %v42 = vld [vmem:[%s0] sm:$0xff]
    %v43 = vld [vmem:[%s0 + $0x8] sm:$0xff]
    %v44 = vld [vmem:[%s0 + $0x10] sm:$0xff]
    %v45 = vpack.c.bf16 %v42, %v42
    %v46 = vpack.c.bf16 %v43, %v43
    %v47 = vpack.c.bf16 %v44, %v44
    %v48 = vld [vmem:[#allocation2] sm:$0xf]
    %v49 = vld [vmem:[#allocation2 + $0x4] sm:$0xf]
    %v50 = vld [vmem:[#allocation2 + $0x8] sm:$0xf]
    %v51 = vld [vmem:[#allocation2 + $0xc] sm:$0xf]
    %v52 = vld [vmem:[#allocation2 + $0x10] sm:$0xf]
    %v53 = vld [vmem:[#allocation2 + $0x14] sm:$0xf]
    %v54 = vld [vmem:[#allocation2 + $0x18] sm:$0xf]
    %v55 = vld [vmem:[#allocation2 + $0x1c] sm:$0xf]
    %v56 = vld [vmem:[#allocation2 + $0x20] sm:$0xf]
    %v57 = vld [vmem:[#allocation2 + $0x24] sm:$0xf]
    %v58 = vld [vmem:[#allocation2 + $0x28] sm:$0xf]
    %v59 = vld [vmem:[#allocation2 + $0x2c] sm:$0xf]
    %v60 = vld [vmem:[#allocation2 + $0x30] sm:$0xf]
    %v61 = vld [vmem:[#allocation2 + $0x34] sm:$0xf]
    %v62 = vld [vmem:[#allocation2 + $0x38] sm:$0xf]
    %v63 = vld [vmem:[#allocation2 + $0x3c] sm:$0xf]
    %v64 = vld [vmem:[#allocation2 + $0x40] sm:$0xf]
    %v65 = vld [vmem:[#allocation2 + $0x44] sm:$0xf]
    %v66 = vld [vmem:[#allocation2 + $0x48] sm:$0xf]
    %v67 = vld [vmem:[#allocation2 + $0x4c] sm:$0xf]
    %v68 = vld [vmem:[#allocation2 + $0x50] sm:$0xf]
    %v69 = vld [vmem:[#allocation2 + $0x54] sm:$0xf]
    %v70 = vld [vmem:[#allocation2 + $0x58] sm:$0xf]
    %v71 = vld [vmem:[#allocation2 + $0x5c] sm:$0xf]
    %v72 = vld [vmem:[#allocation2 + $0x60] sm:$0xf]
    %v73 = vld [vmem:[#allocation2 + $0x64] sm:$0xf]
    %v74 = vld [vmem:[#allocation2 + $0x68] sm:$0xf]
    %v75 = vld [vmem:[#allocation2 + $0x6c] sm:$0xf]
    %v76 = vld [vmem:[#allocation2 + $0x70] sm:$0xf]
    %v77 = vld [vmem:[#allocation2 + $0x74] sm:$0xf]
    %v78 = vld [vmem:[#allocation2 + $0x78] sm:$0xf]
    %v79 = vld [vmem:[#allocation2 + $0x7c] sm:$0xf]
    %v80 = vld [vmem:[#allocation2 + $0x80] sm:$0xf]
    %v81 = vld [vmem:[#allocation2 + $0x84] sm:$0x3]
    %v82 = vld [vmem:[%s2] sm:$0x1]
    %v84 = vlaneseq
    %v85 = vshrl.u32 %v84, 7
    %v86 = vsub.s32 0, %v85
    %v87 = vrot.slane %v82, %v86
    %v123 = vunpack.c.l.b16 %v48
    %v124 = vunpack.c.l.b16 %v49
    %v125 = vunpack.c.l.b16 %v50
    %v126 = vunpack.c.l.b16 %v51
    %v127 = vunpack.c.l.b16 %v52
    %v128 = vunpack.c.l.b16 %v53
    %v129 = vunpack.c.l.b16 %v54
    %v130 = vunpack.c.l.b16 %v55
    %v131 = vunpack.c.l.b16 %v56
    %v132 = vunpack.c.l.b16 %v57
    %v133 = vunpack.c.l.b16 %v58
    %v134 = vunpack.c.l.b16 %v59
    %v135 = vunpack.c.l.b16 %v60
    %v136 = vunpack.c.l.b16 %v61
    %v137 = vunpack.c.l.b16 %v62
    %v138 = vunpack.c.l.b16 %v63
    %v139 = vunpack.c.l.b16 %v64
    %v140 = vunpack.c.l.b16 %v65
    %v141 = vunpack.c.l.b16 %v66
    %v142 = vunpack.c.l.b16 %v67
    %v143 = vunpack.c.l.b16 %v68
    %v144 = vunpack.c.l.b16 %v69
    %v145 = vunpack.c.l.b16 %v70
    %v146 = vunpack.c.l.b16 %v71
    %v147 = vunpack.c.l.b16 %v72
    %v148 = vunpack.c.l.b16 %v73
    %v149 = vunpack.c.l.b16 %v74
    %v150 = vunpack.c.l.b16 %v75
    %v151 = vunpack.c.l.b16 %v76
    %v152 = vunpack.c.l.b16 %v77
    %v153 = vunpack.c.l.b16 %v78
    %v154 = vunpack.c.l.b16 %v79
    %v155 = vunpack.c.l.b16 %v80
    %v156 = vunpack.c.l.b16 %v81
    %v157 = vpack.c.b16 %v124, %v123
    %v158 = vpack.c.b16 %v126, %v125
    %v159 = vpack.c.b16 %v128, %v127
    %v160 = vpack.c.b16 %v130, %v129
    %v161 = vpack.c.b16 %v132, %v131
    %v162 = vpack.c.b16 %v134, %v133
    %v163 = vpack.c.b16 %v136, %v135
    %v164 = vpack.c.b16 %v138, %v137
    %v165 = vpack.c.b16 %v140, %v139
    %v166 = vpack.c.b16 %v142, %v141
    %v167 = vpack.c.b16 %v144, %v143
    %v168 = vpack.c.b16 %v146, %v145
    %v169 = vpack.c.b16 %v148, %v147
    %v170 = vpack.c.b16 %v150, %v149
    %v171 = vpack.c.b16 %v152, %v151
    %v172 = vpack.c.b16 %v154, %v153
    %v173 = vpack.c.b16 %v156, %v155
    %vm190 = vcmask 97280
    %v192 = vsel %vm190, %v47, 0
    %vm194 = vcmask 1045504
    %v196 = vsel %vm194, %v173, 0
    %198 = vmatprep.subr.bf16.mxu0 0
    %199 = vmatpush1.bf16.msra.mxu0 %v157
    %200 = vmatprep.subr.bf16.mxu0 0
    %201 = vmatpush1.bf16.msra.mxu0 %v158
    %202 = vmatprep.subr.bf16.mxu0 0
    %203 = vmatpush1.bf16.msra.mxu0 %v159
    %204 = vmatprep.subr.bf16.mxu0 0
    %205 = vmatpush1.bf16.msra.mxu0 %v160
    %206 = vmatprep.subr.bf16.mxu0 0
    %207 = vmatpush1.bf16.msra.mxu0 %v161
    %208 = vmatprep.subr.bf16.mxu0 0
    %209 = vmatpush1.bf16.msra.mxu0 %v162
    %210 = vmatprep.subr.bf16.mxu0 0
    %211 = vmatpush1.bf16.msra.mxu0 %v163
    %212 = vmatprep.subr.bf16.mxu0 0
    %213 = vmatpush1.bf16.msra.mxu0 %v164
    %214 = vmatprep.subr.bf16.mxu0 0
    %215 = vmatpush1.bf16.msra.mxu0 %v165
    %216 = vmatprep.subr.bf16.mxu0 0
    %217 = vmatpush1.bf16.msra.mxu0 %v166
    %218 = vmatprep.subr.bf16.mxu0 0
    %219 = vmatpush1.bf16.msra.mxu0 %v167
    %220 = vmatprep.subr.bf16.mxu0 0
    %221 = vmatpush1.bf16.msra.mxu0 %v168
    %222 = vmatprep.subr.bf16.mxu0 0
    %223 = vmatpush1.bf16.msra.mxu0 %v169
    %224 = vmatprep.subr.bf16.mxu0 0
    %225 = vmatpush1.bf16.msra.mxu0 %v170
    %226 = vmatprep.subr.bf16.mxu0 0
    %227 = vmatpush1.bf16.msra.mxu0 %v171
    %228 = vmatprep.subr.bf16.mxu0 0
    %229 = vmatpush1.bf16.msra.mxu0 %v172
    %230 = vmatprep.mubr.bf16.mxu0 %v46
    %231 = vmatmul.mubr.bf16.gmra.mrb[0].mxu0 %v45
    %v232 = vpop.f32.mrb[0].mxu0
    %v233 = vadd.f32 %v87, %v232
    %v234 = vpop.f32.mrb[0].mxu0
    %v235 = vpop.f32.mrb[0].mxu0
    %v236 = vpop.f32.mrb[0].mxu0
    %237 = vdwg.mxu0
    %238 = vmatprep.subr.bf16.mxu0 0
    %239 = vmatpush1.bf16.msra.mxu0 %v196
    %240 = vmatprep.subr.bf16.mxu0 0
    %241 = vmatpush1.bf16.msra.mxu0 0
    %242 = vmatprep.subr.bf16.mxu0 0
    %243 = vmatpush1.bf16.msra.mxu0 0
    %244 = vmatprep.subr.bf16.mxu0 0
    %245 = vmatpush1.bf16.msra.mxu0 0
    %246 = vmatprep.subr.bf16.mxu0 0
    %247 = vmatpush1.bf16.msra.mxu0 0
    %248 = vmatprep.subr.bf16.mxu0 0
    %249 = vmatpush1.bf16.msra.mxu0 0
    %250 = vmatprep.subr.bf16.mxu0 0
    %251 = vmatpush1.bf16.msra.mxu0 0
    %252 = vmatprep.subr.bf16.mxu0 0
    %253 = vmatpush1.bf16.msra.mxu0 0
    %254 = vmatprep.subr.bf16.mxu0 0
    %255 = vmatpush1.bf16.msra.mxu0 0
    %256 = vmatprep.subr.bf16.mxu0 0
    %257 = vmatpush1.bf16.msra.mxu0 0
    %258 = vmatprep.subr.bf16.mxu0 0
    %259 = vmatpush1.bf16.msra.mxu0 0
    %260 = vmatprep.subr.bf16.mxu0 0
    %261 = vmatpush1.bf16.msra.mxu0 0
    %262 = vmatprep.subr.bf16.mxu0 0
    %263 = vmatpush1.bf16.msra.mxu0 0
    %264 = vmatprep.subr.bf16.mxu0 0
    %265 = vmatpush1.bf16.msra.mxu0 0
    %266 = vmatprep.subr.bf16.mxu0 0
    %267 = vmatpush1.bf16.msra.mxu0 0
    %268 = vmatprep.subr.bf16.mxu0 0
    %269 = vmatpush1.bf16.msra.mxu0 0
    %270 = vmatprep.mubr.bf16.mxu0 0
    %271 = vmatmul.mubr.bf16.gmra.mrb[0].mxu0 %v192
    %v272 = vpop.f32.mrb[0].mxu0
    %v273 = vadd.f32 %v233, %v272
    %v274 = vpop.f32.mrb[0].mxu0
    %v275 = vpop.f32.mrb[0].mxu0
    %v276 = vpop.f32.mrb[0].mxu0
    %277 = vdwg.mxu0
    %v278 = vmax.f32 %v273, 0.0
    %v279 = vpack.c.bf16 %v278, %v278
    %v280 = vld [vmem:[%s3] sm:$0xf]
    %v281 = vld [vmem:[%s3 + $0x4] sm:$0xf]
    %v282 = vld [vmem:[%s3 + $0x8] sm:$0xf]
    %v283 = vld [vmem:[%s3 + $0xc] sm:$0xf]
    %v284 = vld [vmem:[%s3 + $0x10] sm:$0xf]
    %v285 = vld [vmem:[%s3 + $0x14] sm:$0xf]
    %v286 = vld [vmem:[%s3 + $0x18] sm:$0xf]
    %v287 = vld [vmem:[%s3 + $0x1c] sm:$0xf]
    %v288 = vld [vmem:[%s3 + $0x20] sm:$0xf]
    %v289 = vld [vmem:[%s3 + $0x24] sm:$0xf]
    %v290 = vld [vmem:[%s3 + $0x28] sm:$0xf]
    %v291 = vld [vmem:[%s3 + $0x2c] sm:$0xf]
    %v292 = vld [vmem:[%s3 + $0x30] sm:$0xf]
    %v293 = vld [vmem:[%s3 + $0x34] sm:$0xf]
    %v294 = vld [vmem:[%s3 + $0x38] sm:$0xf]
    %v295 = vld [vmem:[%s3 + $0x3c] sm:$0xf]
    %v296 = vld [vmem:[%s4] sm:$0x1]
    %v298 = vlaneseq
    %v299 = vshrl.u32 %v298, 7
    %v300 = vsub.s32 0, %v299
    %v301 = vrot.slane %v296, %v300
    %v319 = vunpack.c.l.b16 %v280
    %v320 = vunpack.c.l.b16 %v281
    %v321 = vunpack.c.l.b16 %v282
    %v322 = vunpack.c.l.b16 %v283
    %v323 = vunpack.c.l.b16 %v284
    %v324 = vunpack.c.l.b16 %v285
    %v325 = vunpack.c.l.b16 %v286
    %v326 = vunpack.c.l.b16 %v287
    %v327 = vunpack.c.l.b16 %v288
    %v328 = vunpack.c.l.b16 %v289
    %v329 = vunpack.c.l.b16 %v290
    %v330 = vunpack.c.l.b16 %v291
    %v331 = vunpack.c.l.b16 %v292
    %v332 = vunpack.c.l.b16 %v293
    %v333 = vunpack.c.l.b16 %v294
    %v334 = vunpack.c.l.b16 %v295
    %v335 = vpack.c.b16 %v320, %v319
    %v336 = vpack.c.b16 %v322, %v321
    %v337 = vpack.c.b16 %v324, %v323
    %v338 = vpack.c.b16 %v326, %v325
    %v339 = vpack.c.b16 %v328, %v327
    %v340 = vpack.c.b16 %v330, %v329
    %v341 = vpack.c.b16 %v332, %v331
    %v342 = vpack.c.b16 %v334, %v333
    %351 = vmatprep.subr.bf16.mxu0 0
    %352 = vmatpush1.bf16.msra.mxu0 %v335
    %353 = vmatprep.subr.bf16.mxu0 0
    %354 = vmatpush1.bf16.msra.mxu0 %v336
    %355 = vmatprep.subr.bf16.mxu0 0
    %356 = vmatpush1.bf16.msra.mxu0 %v337
    %357 = vmatprep.subr.bf16.mxu0 0
    %358 = vmatpush1.bf16.msra.mxu0 %v338
    %359 = vmatprep.subr.bf16.mxu0 0
    %360 = vmatpush1.bf16.msra.mxu0 %v339
    %361 = vmatprep.subr.bf16.mxu0 0
    %362 = vmatpush1.bf16.msra.mxu0 %v340
    %363 = vmatprep.subr.bf16.mxu0 0
    %364 = vmatpush1.bf16.msra.mxu0 %v341
    %365 = vmatprep.subr.bf16.mxu0 0
    %366 = vmatpush1.bf16.msra.mxu0 %v342
    %367 = vmatprep.subr.bf16.mxu0 0
    %368 = vmatpush1.bf16.msra.mxu0 0
    %369 = vmatprep.subr.bf16.mxu0 0
    %370 = vmatpush1.bf16.msra.mxu0 0
    %371 = vmatprep.subr.bf16.mxu0 0
    %372 = vmatpush1.bf16.msra.mxu0 0
    %373 = vmatprep.subr.bf16.mxu0 0
    %374 = vmatpush1.bf16.msra.mxu0 0
    %375 = vmatprep.subr.bf16.mxu0 0
    %376 = vmatpush1.bf16.msra.mxu0 0
    %377 = vmatprep.subr.bf16.mxu0 0
    %378 = vmatpush1.bf16.msra.mxu0 0
    %379 = vmatprep.subr.bf16.mxu0 0
    %380 = vmatpush1.bf16.msra.mxu0 0
    %381 = vmatprep.subr.bf16.mxu0 0
    %382 = vmatpush1.bf16.msra.mxu0 0
    %383 = vmatprep.mubr.bf16.mxu0 0
    %384 = vmatmul.mubr.bf16.gmra.mrb[0].mxu0 %v279
    %v385 = vpop.f32.mrb[0].mxu0
    %v386 = vadd.f32 %v301, %v385
    %v387 = vpop.f32.mrb[0].mxu0
    %v388 = vpop.f32.mrb[0].mxu0
    %v389 = vpop.f32.mrb[0].mxu0
    %390 = vdwg.mxu0
    %v391 = vmax.f32 %v386, 0.0
    %v392 = vpack.c.bf16 %v391, %v391
    %v393 = vld [vmem:[%s5] sm:$0xf]
    %v394 = vld [vmem:[%s5 + $0x4] sm:$0xf]
    %v395 = vld [vmem:[%s5 + $0x8] sm:$0xf]
    %v396 = vld [vmem:[%s5 + $0xc] sm:$0xf]
    %v397 = vld [vmem:[%s5 + $0x10] sm:$0xf]
    %v398 = vld [vmem:[%s5 + $0x14] sm:$0xf]
    %v399 = vld [vmem:[%s5 + $0x18] sm:$0xf]
    %v400 = vld [vmem:[%s5 + $0x1c] sm:$0xf]
    %v401 = vld [vmem:[%s6] sm:$0x1]
    %v403 = vlaneseq
    %v404 = vshrl.u32 %v403, 7
    %v405 = vsub.s32 0, %v404
    %v406 = vrot.slane %v401, %v405
    %v416 = vunpack.c.l.b16 %v393
    %v417 = vunpack.c.l.b16 %v394
    %v418 = vunpack.c.l.b16 %v395
    %v419 = vunpack.c.l.b16 %v396
    %v420 = vunpack.c.l.b16 %v397
    %v421 = vunpack.c.l.b16 %v398
    %v422 = vunpack.c.l.b16 %v399
    %v423 = vunpack.c.l.b16 %v400
    %v424 = vpack.c.b16 %v417, %v416
    %v425 = vpack.c.b16 %v419, %v418
    %v426 = vpack.c.b16 %v421, %v420
    %v427 = vpack.c.b16 %v423, %v422
    %vm432 = vcmask 523264
    %v434 = vsel %vm432, %v392, 0
    %436 = vmatprep.subr.bf16.mxu0 0
    %437 = vmatpush1.bf16.msra.mxu0 %v424
    %438 = vmatprep.subr.bf16.mxu0 0
    %439 = vmatpush1.bf16.msra.mxu0 %v425
    %440 = vmatprep.subr.bf16.mxu0 0
    %441 = vmatpush1.bf16.msra.mxu0 %v426
    %442 = vmatprep.subr.bf16.mxu0 0
    %443 = vmatpush1.bf16.msra.mxu0 %v427
    %444 = vmatprep.subr.bf16.mxu0 0
    %445 = vmatpush1.bf16.msra.mxu0 0
    %446 = vmatprep.subr.bf16.mxu0 0
    %447 = vmatpush1.bf16.msra.mxu0 0
    %448 = vmatprep.subr.bf16.mxu0 0
    %449 = vmatpush1.bf16.msra.mxu0 0
    %450 = vmatprep.subr.bf16.mxu0 0
    %451 = vmatpush1.bf16.msra.mxu0 0
    %452 = vmatprep.subr.bf16.mxu0 0
    %453 = vmatpush1.bf16.msra.mxu0 0
    %454 = vmatprep.subr.bf16.mxu0 0
    %455 = vmatpush1.bf16.msra.mxu0 0
    %456 = vmatprep.subr.bf16.mxu0 0
    %457 = vmatpush1.bf16.msra.mxu0 0
    %458 = vmatprep.subr.bf16.mxu0 0
    %459 = vmatpush1.bf16.msra.mxu0 0
    %460 = vmatprep.subr.bf16.mxu0 0
    %461 = vmatpush1.bf16.msra.mxu0 0
    %462 = vmatprep.subr.bf16.mxu0 0
    %463 = vmatpush1.bf16.msra.mxu0 0
    %464 = vmatprep.subr.bf16.mxu0 0
    %465 = vmatpush1.bf16.msra.mxu0 0
    %466 = vmatprep.subr.bf16.mxu0 0
    %467 = vmatpush1.bf16.msra.mxu0 0
    %468 = vmatprep.mubr.bf16.mxu0 0
    %469 = vmatmul.mubr.bf16.gmra.mrb[0].mxu0 %v434
    %v470 = vpop.f32.mrb[0].mxu0
    %v471 = vadd.f32 %v406, %v470
    %v472 = vpop.f32.mrb[0].mxu0
    %v473 = vpop.f32.mrb[0].mxu0
    %v474 = vpop.f32.mrb[0].mxu0
    %475 = vdwg.mxu0
    %vm476 = vcmask 64512
    %477 = vst.msk [vmem:[#allocation5] sm:$0xff] %vm476, %v471
    // Predicated region
    $region34: #{tpu_custom_call.1} parent=1 // pred_check
      _
    $region35: #{tpu_custom_call.1} parent=1 // pred_check_branch
      %479 = sbr.rel (0) target = $region37
    $region36: #{tpu_custom_call.1} parent=1 // pred_region
      %s481 = ssub.s32 128, 128
      %482 = vsyncadd [#allocation4], %s481
      %s484 = sshll.u32 [#allocation5], 4
      %s485 = int_to_ptr.vmem [resolvable:$true] %s484
      %487 = dma.vmem_to_hbm [thread:$0]  %s485, 128, %s7, [#allocation4]
    $region37: #{tpu_custom_call.1} parent=1 // pred_fallthru
      _
    // Predicated region
    $region38: #{tpu_custom_call.1} parent=1 // pred_check
      _
    $region39: #{tpu_custom_call.1} parent=1 // pred_check_branch
      %489 = sbr.rel (0) target = $region41
    $region40: #{tpu_custom_call.1} parent=1 // pred_region
      %490 = dma.done [#allocation4], 128
    $region41: #{tpu_custom_call.1} parent=1 // pred_fallthru
      _
    %491 = vsyncpa [#allocation3], 1
    %492 = vsyncpa [#allocation4], 1

</llo_original>
